<compile_context>
chip_gen: v5e
topology: v5e:2x2
jax: 0.10.0
libtpu: 0.0.40
codegen_flags: <defaults>
</compile_context>

<pallas_src>
import jax
import jax.numpy as jnp
from jax.experimental import pallas as pl
from jax.experimental.pallas import tpu as pltpu

BN_EPS = 1e-5
_VMEM_LIMIT = 32 * 1024 * 1024   # safe scoped-VMEM budget on v5e / v6e / v7x


# --------------------------------------------------------------------------- #
# in-kernel building blocks
# --------------------------------------------------------------------------- #
def _conv1(x, w, b):
    """Cin == 3: three VPU broadcast-FMAs keep the MXU free.  x:(3,TM) -> (64,TM)."""
    return (w[:, 0:1] * x[0:1, :]
            + w[:, 1:2] * x[1:2, :]
            + w[:, 2:3] * x[2:3, :]
            + b)


# --------------------------------------------------------------------------- #
# kernels (grid = (batch, point_tile); batch axis is "parallel")
# --------------------------------------------------------------------------- #
def _stats1_kernel(x_ref, w1_ref, b1_ref, s_ref, ss_ref):
    """Raw conv1 output for one point tile -> per-(batch,channel) sum/sumsq."""
    @pl.when(pl.program_id(1) == 0)
    def _():
        s_ref[...] = jnp.zeros_like(s_ref)
        ss_ref[...] = jnp.zeros_like(ss_ref)

    y1 = _conv1(x_ref[...], w1_ref[...], b1_ref[...])                    # (64, TM)
    s_ref[...] += jnp.sum(y1, axis=1, keepdims=True)[None]
    ss_ref[...] += jnp.sum(y1 * y1, axis=1, keepdims=True)[None]


def _stats2_kernel(x_ref, w1_ref, b1_ref, sc1_ref, sh1_ref, w2_ref, b2_ref,
                   s_ref, ss_ref):
    """Recompute conv1, fold bn1+relu into the load, raw conv2 -> sum/sumsq."""
    @pl.when(pl.program_id(1) == 0)
    def _():
        s_ref[...] = jnp.zeros_like(s_ref)
        ss_ref[...] = jnp.zeros_like(ss_ref)

    y1 = _conv1(x_ref[...], w1_ref[...], b1_ref[...])                    # (64, TM)
    h1 = jnp.maximum(y1 * sc1_ref[...] + sh1_ref[...], 0.0)
    y2 = jnp.dot(w2_ref[...], h1, preferred_element_type=jnp.float32) + b2_ref[...]
    s_ref[...] += jnp.sum(y2, axis=1, keepdims=True)[None]
    ss_ref[...] += jnp.sum(y2 * y2, axis=1, keepdims=True)[None]


def _final_kernel(x_ref, w1_ref, b1_ref, sc1_ref, sh1_ref,
                  w2_ref, b2_ref, sc2_ref, sh2_ref, w3_ref, b3_ref,
                  s_ref, ss_ref, mx_ref, mn_ref):
    """Recompute conv1->bn1->relu->conv2->bn2->relu->conv3; reduce on the fly:
    per-(batch,channel) sum/sumsq + running max and min of the raw conv3 output."""
    @pl.when(pl.program_id(1) == 0)
    def _():
        s_ref[...] = jnp.zeros_like(s_ref)
        ss_ref[...] = jnp.zeros_like(ss_ref)
        mx_ref[...] = jnp.full(mx_ref.shape, -jnp.inf, mx_ref.dtype)
        mn_ref[...] = jnp.full(mn_ref.shape, jnp.inf, mn_ref.dtype)

    y1 = _conv1(x_ref[...], w1_ref[...], b1_ref[...])                    # (64, TM)
    h1 = jnp.maximum(y1 * sc1_ref[...] + sh1_ref[...], 0.0)
    y2 = jnp.dot(w2_ref[...], h1, preferred_element_type=jnp.float32) + b2_ref[...]
    h2 = jnp.maximum(y2 * sc2_ref[...] + sh2_ref[...], 0.0)              # (128, TM)
    y3 = jnp.dot(w3_ref[...], h2, preferred_element_type=jnp.float32) + b3_ref[...]

    s_ref[...] += jnp.sum(y3, axis=1, keepdims=True)[None]
    ss_ref[...] += jnp.sum(y3 * y3, axis=1, keepdims=True)[None]
    mx_ref[...] = jnp.maximum(mx_ref[...], jnp.max(y3, axis=1, keepdims=True)[None])
    mn_ref[...] = jnp.minimum(mn_ref[...], jnp.min(y3, axis=1, keepdims=True)[None])


# --------------------------------------------------------------------------- #
# wrapper
# --------------------------------------------------------------------------- #
def _bn_affine(s, ss, g, be, m):
    """Fold training-mode BN into per-channel scale/shift: bn(y) = y*scale + shift.
    s, ss are per-batch partials (B, C, 1) summed here (better f32 accumulation)."""
    s = jnp.sum(s, axis=0)                           # (C, 1)
    ss = jnp.sum(ss, axis=0)
    mu = s / m
    var = jnp.maximum(ss / m - mu * mu, 0.0)         # biased variance, clamped >= 0
    scale = g * jax.lax.rsqrt(var + BN_EPS)
    shift = be - mu * scale
    return scale, shift


def _pick_tile(n_points, max_tile):
    """Largest TM <= max_tile that is a multiple of 128 and divides N."""
    if n_points % 128 != 0:
        raise ValueError("num_points must be a multiple of 128")
    t = max(128, min(max_tile, n_points))
    t -= t % 128
    while n_points % t != 0:
        t -= 128
    return t


def pointnetfeat_forward(x, params, *, max_tile=4096):
    """x: (B, 3, N) float32 -> (B, code_nfts) float32 (training-mode BatchNorm)."""
    B, C, N = x.shape
    assert C == 3
    K = params["w3"].shape[0]
    M = B * N
    TM = _pick_tile(N, max_tile)
    grid = (B, N // TM)
    f32 = jnp.float32

    # (B,3,N) tiled directly: batch squeezed, points on the lane axis (lane-dense).
    x_spec = pl.BlockSpec((pl.Squeezed(), 3, TM), lambda b, i: (b, 0, i))
    const = lambda shape: pl.BlockSpec(shape, lambda b, i: (0, 0))
    acc = lambda c: pl.BlockSpec((1, c, 1), lambda b, i: (b, 0, 0))   # per-batch block
    acc_shape = lambda c: jax.ShapeDtypeStruct((B, c, 1), f32)

    def call_params(flops, bytes_accessed):
        return dict(
            compiler_params=pltpu.CompilerParams(
                # batch axis parallel (uses both TCs on v7x), point tiles arbitrary
                dimension_semantics=("parallel", "arbitrary"),
                vmem_limit_bytes=_VMEM_LIMIT),
            cost_estimate=pl.CostEstimate(flops=int(flops), transcendentals=0,
                                          bytes_accessed=int(bytes_accessed)),
        )

    # ---- pass 1: conv1 stats ----------------------------------------------
    s1, ss1 = pl.pallas_call(
        _stats1_kernel,
        grid=grid,
        in_specs=[x_spec, const((64, 3)), const((64, 1))],
        out_specs=(acc(64), acc(64)),
        out_shape=(acc_shape(64), acc_shape(64)),
        **call_params(flops=10 * M * 64, bytes_accessed=4 * M * 3),
    )(x, params["w1"], params["b1"])
    sc1, sh1 = _bn_affine(s1, ss1, params["g1"], params["be1"], M)

    # ---- pass 2: recompute conv1, bn1+relu fused, conv2 stats --------------
    s2, ss2 = pl.pallas_call(
        _stats2_kernel,
        grid=grid,
        in_specs=[x_spec, const((64, 3)), const((64, 1)),
                  const((64, 1)), const((64, 1)),
                  const((128, 64)), const((128, 1))],
        out_specs=(acc(128), acc(128)),
        out_shape=(acc_shape(128), acc_shape(128)),
        **call_params(flops=2 * M * 64 * 128, bytes_accessed=4 * M * 3),
    )(x, params["w1"], params["b1"], sc1, sh1, params["w2"], params["b2"])
    sc2, sh2 = _bn_affine(s2, ss2, params["g2"], params["be2"], M)

    # ---- pass 3: recompute conv1->conv2, bn2+relu fused, conv3 reduced -----
    s3, ss3, mx, mn = pl.pallas_call(
        _final_kernel,
        grid=grid,
        in_specs=[x_spec, const((64, 3)), const((64, 1)),
                  const((64, 1)), const((64, 1)),
                  const((128, 64)), const((128, 1)),
                  const((128, 1)), const((128, 1)),
                  const((K, 128)), const((K, 1))],
        out_specs=(acc(K), acc(K), acc(K), acc(K)),
        out_shape=(acc_shape(K), acc_shape(K), acc_shape(K), acc_shape(K)),
        **call_params(flops=2 * M * (64 * 128 + 128 * K), bytes_accessed=4 * M * 3),
    )(x, params["w1"], params["b1"], sc1, sh1,
      params["w2"], params["b2"], sc2, sh2, params["w3"], params["b3"])
    sc3, sh3 = _bn_affine(s3, ss3, params["g3"], params["be3"], M)

    # max(bn3(y)) == bn3(max(y)) when scale>=0, bn3(min(y)) when scale<0.
    raw = jnp.where(sc3[None] >= 0.0, mx, mn)        # (B, K, 1)
    return (raw * sc3[None] + sh3[None])[:, :, 0]    # (B, K)


# --------------------------------------------------------------------------- #
# reference + test
# --------------------------------------------------------------------------- #
def pointnetfeat_reference(x, params):
    """Pure-JAX reference mirroring the PyTorch forward (training-mode BN)."""
    B, C, N = x.shape
    h = jnp.transpose(x, (0, 2, 1)).reshape(B * N, C)

    def block(h, w, b, g, be):
        y = h @ w.T + b[:, 0]
        mu = jnp.mean(y, axis=0, keepdims=True)
        var = jnp.mean((y - mu) ** 2, axis=0, keepdims=True)
        return (y - mu) / jnp.sqrt(var + BN_EPS) * g[:, 0] + be[:, 0]

    h = jnp.maximum(block(h, params["w1"], params["b1"], params["g1"], params["be1"]), 0.0)
    h = jnp.maximum(block(h, params["w2"], params["b2"], params["g2"], params["be2"]), 0.0)
    h = block(h, params["w3"], params["b3"], params["g3"], params["be3"])
    return jnp.max(h.reshape(B, N, -1), axis=1)


def make_params(key, code_nfts):
    """Deterministic synthetic parameters (shapes match the nn.Module)."""
    ks = jax.random.split(key, 12)
    dims = [(3, 64), (64, 128), (128, code_nfts)]
    params = {}
    for i, (cin, cout) in enumerate(dims, start=1):
        kw, kb, kg, kbe = ks[4 * (i - 1):4 * i]
        # torch Conv1d weight is (cout, cin, 1); we store the squeezed (cout, cin).
        params[f"w{i}"] = jax.random.normal(kw, (cout, cin), jnp.float32) * 0.1
        params[f"b{i}"] = jax.random.normal(kb, (cout, 1), jnp.float32) * 0.05
        params[f"g{i}"] = 1.0 + jax.random.normal(kg, (cout, 1), jnp.float32) * 0.05
        params[f"be{i}"] = jax.random.normal(kbe, (cout, 1), jnp.float32) * 0.05
    return params


if __name__ == "__main__":
    B, N = 2, 256          # batch, number of points (multiple of 128)
    CODE_NFTS = 32         # args.code_nfts

    key = jax.random.PRNGKey(0)
    kx, kp = jax.random.split(key)
    x = jax.random.normal(kx, (B, 3, N), jnp.float32)
    params = make_params(kp, CODE_NFTS)
    # Flip some bn3 gammas negative so the min-accumulator path is exercised.
    sign = jnp.where(jnp.arange(CODE_NFTS)[:, None] % 3 == 0, -1.0, 1.0)
    params["g3"] = params["g3"] * sign

    ref = pointnetfeat_reference(x, params)

    # max_tile=128 -> 2 point tiles per batch: exercises cross-tile accumulation,
    # per-batch accumulator init and the per-batch running max/min.
    out_small = jax.block_until_ready(pointnetfeat_forward(x, params, max_tile=128))
    assert out_small.shape == (B, CODE_NFTS)
    assert jnp.allclose(out_small, ref, rtol=1e-3, atol=1e-3), "mismatch (TM=128)"

    # Default (large-tile) configuration: single tile per batch.
    out_big = jax.block_until_ready(pointnetfeat_forward(x, params))
    assert jnp.allclose(out_big, ref, rtol=1e-3, atol=1e-3), "mismatch (default TM)"

    print("KERNEL_OK")
</pallas_src>

<mosaic_0001>
module attributes {stable_mosaic.version = 11 : i64} {
  func.func @_stats1_kernel(%arg0: i32, %arg1: i32, %arg2: memref<1x3x128xf32, #tpu.memory_space<vmem>>, %arg3: memref<64x3xf32, #tpu.memory_space<vmem>>, %arg4: memref<64x1xf32, #tpu.memory_space<vmem>>, %arg5: memref<1x64x1xf32, #tpu.memory_space<vmem>>, %arg6: memref<1x64x1xf32, #tpu.memory_space<vmem>>) attributes {dimension_semantics = [#tpu.dimension_semantics<parallel>, #tpu.dimension_semantics<arbitrary>], iteration_bounds = array<i64: 2, 2>, scalar_prefetch = 0 : i64, scratch_operands = 0 : i64, tpu.core_type = #tpu.core_type<tc>, window_params = [{transform_indices = @transform_0, window_bounds = array<i64: 1, 3, 128>}, {pipeline_mode = #tpu.pipeline_mode<synchronous>, transform_indices = @transform_1, window_bounds = array<i64: 64, 3>}, {pipeline_mode = #tpu.pipeline_mode<synchronous>, transform_indices = @transform_2, window_bounds = array<i64: 64, 1>}, {transform_indices = @transform_3, window_bounds = array<i64: 1, 64, 1>}, {transform_indices = @transform_4, window_bounds = array<i64: 1, 64, 1>}]} {
    %c0_i32 = arith.constant 0 : i32
    %0 = arith.cmpi eq, %arg1, %c0_i32 : i32
    %1 = arith.extui %0 : i1 to i32
    %c0_i32_0 = arith.constant 0 : i32
    %2 = arith.cmpi ne, %1, %c0_i32_0 : i32
    scf.if %2 {
      %cst_20 = arith.constant 0.000000e+00 : f32
      %39 = vector.broadcast %cst_20 : f32 to vector<1x64x1xf32>
      %c0_21 = arith.constant 0 : index
      %c0_22 = arith.constant 0 : index
      %c0_23 = arith.constant 0 : index
      %40 = vector.load %arg5[%c0_21, %c0_22, %c0_23] : memref<1x64x1xf32, #tpu.memory_space<vmem>>, vector<1x64x1xf32>
      tpu.vector_store %arg5[%c0_21, %c0_22, %c0_23], %39 {strides = array<i32>} : memref<1x64x1xf32, #tpu.memory_space<vmem>>, vector<1x64x1xf32>,
      %cst_24 = arith.constant 0.000000e+00 : f32
      %41 = vector.broadcast %cst_24 : f32 to vector<1x64x1xf32>
      %c0_25 = arith.constant 0 : index
      %c0_26 = arith.constant 0 : index
      %c0_27 = arith.constant 0 : index
      %42 = vector.load %arg6[%c0_25, %c0_26, %c0_27] : memref<1x64x1xf32, #tpu.memory_space<vmem>>, vector<1x64x1xf32>
      tpu.vector_store %arg6[%c0_25, %c0_26, %c0_27], %41 {strides = array<i32>} : memref<1x64x1xf32, #tpu.memory_space<vmem>>, vector<1x64x1xf32>,
    } else {
    }
    %c0 = arith.constant 0 : index
    %c0_1 = arith.constant 0 : index
    %c0_2 = arith.constant 0 : index
    %3 = vector.load %arg2[%c0, %c0_1, %c0_2] : memref<1x3x128xf32, #tpu.memory_space<vmem>>, vector<1x3x128xf32>
    %4 = vector.shape_cast %3 : vector<1x3x128xf32> to vector<3x128xf32>
    %c0_3 = arith.constant 0 : index
    %c0_4 = arith.constant 0 : index
    %5 = vector.load %arg3[%c0_3, %c0_4] : memref<64x3xf32, #tpu.memory_space<vmem>>, vector<64x3xf32>
    %c0_5 = arith.constant 0 : index
    %c0_6 = arith.constant 0 : index
    %6 = vector.load %arg4[%c0_5, %c0_6] : memref<64x1xf32, #tpu.memory_space<vmem>>, vector<64x1xf32>
    %7 = vector.extract_strided_slice %5 {offsets = [0, 0], sizes = [64, 1], strides = [1, 1]} : vector<64x3xf32> to vector<64x1xf32>
    %8 = vector.extract_strided_slice %4 {offsets = [0, 0], sizes = [1, 128], strides = [1, 1]} : vector<3x128xf32> to vector<1x128xf32>
    %9 = vector.broadcast %7 : vector<64x1xf32> to vector<64x128xf32>
    %10 = vector.broadcast %8 : vector<1x128xf32> to vector<64x128xf32>
    %11 = arith.mulf %9, %10 : vector<64x128xf32>
    %12 = vector.extract_strided_slice %5 {offsets = [0, 1], sizes = [64, 1], strides = [1, 1]} : vector<64x3xf32> to vector<64x1xf32>
    %13 = vector.extract_strided_slice %4 {offsets = [1, 0], sizes = [1, 128], strides = [1, 1]} : vector<3x128xf32> to vector<1x128xf32>
    %14 = vector.broadcast %12 : vector<64x1xf32> to vector<64x128xf32>
    %15 = vector.broadcast %13 : vector<1x128xf32> to vector<64x128xf32>
    %16 = arith.mulf %14, %15 : vector<64x128xf32>
    %17 = arith.addf %11, %16 : vector<64x128xf32>
    %18 = vector.extract_strided_slice %5 {offsets = [0, 2], sizes = [64, 1], strides = [1, 1]} : vector<64x3xf32> to vector<64x1xf32>
    %19 = vector.extract_strided_slice %4 {offsets = [2, 0], sizes = [1, 128], strides = [1, 1]} : vector<3x128xf32> to vector<1x128xf32>
    %20 = vector.broadcast %18 : vector<64x1xf32> to vector<64x128xf32>
    %21 = vector.broadcast %19 : vector<1x128xf32> to vector<64x128xf32>
    %22 = arith.mulf %20, %21 : vector<64x128xf32>
    %23 = arith.addf %17, %22 : vector<64x128xf32>
    %24 = vector.broadcast %6 : vector<64x1xf32> to vector<64x128xf32>
    %25 = arith.addf %23, %24 : vector<64x128xf32>
    %c0_7 = arith.constant 0 : index
    %c0_8 = arith.constant 0 : index
    %c0_9 = arith.constant 0 : index
    %26 = vector.load %arg5[%c0_7, %c0_8, %c0_9] : memref<1x64x1xf32, #tpu.memory_space<vmem>>, vector<1x64x1xf32>
    %cst = arith.constant dense<0.000000e+00> : vector<64xf32>
    %27 = vector.multi_reduction <add>, %25, %cst [1] : vector<64x128xf32> to vector<64xf32>
    %28 = vector.shape_cast %27 : vector<64xf32> to vector<64x1xf32>
    %29 = vector.shape_cast %28 : vector<64x1xf32> to vector<1x64x1xf32>
    %30 = arith.addf %26, %29 : vector<1x64x1xf32>
    %c0_10 = arith.constant 0 : index
    %c0_11 = arith.constant 0 : index
    %c0_12 = arith.constant 0 : index
    %31 = vector.load %arg5[%c0_10, %c0_11, %c0_12] : memref<1x64x1xf32, #tpu.memory_space<vmem>>, vector<1x64x1xf32>
    tpu.vector_store %arg5[%c0_10, %c0_11, %c0_12], %30 {strides = array<i32>} : memref<1x64x1xf32, #tpu.memory_space<vmem>>, vector<1x64x1xf32>,
    %c0_13 = arith.constant 0 : index
    %c0_14 = arith.constant 0 : index
    %c0_15 = arith.constant 0 : index
    %32 = vector.load %arg6[%c0_13, %c0_14, %c0_15] : memref<1x64x1xf32, #tpu.memory_space<vmem>>, vector<1x64x1xf32>
    %33 = arith.mulf %25, %25 : vector<64x128xf32>
    %cst_16 = arith.constant dense<0.000000e+00> : vector<64xf32>
    %34 = vector.multi_reduction <add>, %33, %cst_16 [1] : vector<64x128xf32> to vector<64xf32>
    %35 = vector.shape_cast %34 : vector<64xf32> to vector<64x1xf32>
    %36 = vector.shape_cast %35 : vector<64x1xf32> to vector<1x64x1xf32>
    %37 = arith.addf %32, %36 : vector<1x64x1xf32>
    %c0_17 = arith.constant 0 : index
    %c0_18 = arith.constant 0 : index
    %c0_19 = arith.constant 0 : index
    %38 = vector.load %arg6[%c0_17, %c0_18, %c0_19] : memref<1x64x1xf32, #tpu.memory_space<vmem>>, vector<1x64x1xf32>
    tpu.vector_store %arg6[%c0_17, %c0_18, %c0_19], %37 {strides = array<i32>} : memref<1x64x1xf32, #tpu.memory_space<vmem>>, vector<1x64x1xf32>,
    return
  }
  func.func @transform_0(%arg0: i32, %arg1: i32) -> (i32, i32, i32) {
    %c0_i32 = arith.constant 0 : i32
    %c0_i32_0 = arith.constant 0 : i32
    return %arg0, %c0_i32, %arg1 : i32, i32, i32
  }
  func.func @transform_1(%arg0: i32, %arg1: i32) -> (i32, i32) {
    %c0_i32 = arith.constant 0 : i32
    %c0_i32_0 = arith.constant 0 : i32
    %c0_i32_1 = arith.constant 0 : i32
    return %c0_i32, %c0_i32_0 : i32, i32
  }
  func.func @transform_2(%arg0: i32, %arg1: i32) -> (i32, i32) {
    %c0_i32 = arith.constant 0 : i32
    %c0_i32_0 = arith.constant 0 : i32
    %c0_i32_1 = arith.constant 0 : i32
    return %c0_i32, %c0_i32_0 : i32, i32
  }
  func.func @transform_3(%arg0: i32, %arg1: i32) -> (i32, i32, i32) {
    %c0_i32 = arith.constant 0 : i32
    %c0_i32_0 = arith.constant 0 : i32
    %c0_i32_1 = arith.constant 0 : i32
    return %arg0, %c0_i32, %c0_i32_0 : i32, i32, i32
  }
  func.func @transform_4(%arg0: i32, %arg1: i32) -> (i32, i32, i32) {
    %c0_i32 = arith.constant 0 : i32
    %c0_i32_0 = arith.constant 0 : i32
    %c0_i32_1 = arith.constant 0 : i32
    return %arg0, %c0_i32, %c0_i32_0 : i32, i32, i32
  }
}

</mosaic_0001>

<llo_original>
// kernel: tpu_custom_call.1
$region0: #{tpu_custom_call.1}
  #allocation0 [shape = 'u32[]', space=smem, size = 0x4, offset = 0x4, fixed_abs, tag = 'smem constant byte address 0x4 - core index']
  #allocation1 [shape = 'u32[72,128]{1,0:T(1,128)}', space=vmem, size = 0x9000, scoped, tag = 'internal scratch']
  %s0 = inlined_call_operand.vmem [shape: f32[2,3,256], index: 0, kind: input, shape index: {}]
  %s1 = inlined_call_operand.vmem [shape: f32[64,3], index: 1, kind: input, shape index: {}]
  %s2 = inlined_call_operand.vmem [shape: f32[64,1], index: 2, kind: input, shape index: {}]
  %s3 = inlined_call_operand.vmem [shape: f32[2,64,1], index: 3, kind: output, shape index: {0}]
  %s4 = inlined_call_operand.vmem [shape: f32[2,64,1], index: 4, kind: output, shape index: {1}]
  %5 = xla_tuple %s3, %s4
  %s6 = sld [smem:[#allocation0]]
  $region57: #{tpu_custom_call.1} parent=0
    _
  %s8 = ssub.s32 1, %s6
  %s9 = scalar_select 0, %s8, %s6
  loop: start=0, step=1, limit=6
  $region2: #{tpu_custom_call.1} parent=0 // loop_pre_header
    _
  $region3: #{tpu_custom_call.1} parent=0 // loop_header
    %s11 = sphi 0, %s15
    %p12 = scmp.ge.s32.totalorder %s11, 6
    %s18 = sphi 0, %s30
    %s19 = sphi 0, %s26
    %s20 = sphi 0, %s18
    %s21 = sphi 0, %s19
    %s22 = sphi 0, %s20
    %s23 = sphi 0, %s21
    %s35 = sphi 0, %s37
    %s38 = sphi 0, %s35
    %s39 = sphi 0, %s38
    %s55 = sphi 0, %s39
    %s59 = sphi 0, %s59
    %s61 = sphi 0, %s59
    %s62 = sphi 0, %s61
    %s76 = sphi 0, %s62
    %s80 = sphi 0, %s80
    %s82 = sphi 0, %s80
    %s83 = sphi 0, %s82
    %s97 = sphi 0, %s83
    %s103 = sphi 0, %s105
    %s106 = sphi 0, %s103
    %s107 = sphi 0, %s106
    %s123 = sphi 0, %s107
    %s129 = sphi 0, %s131
    %s132 = sphi 0, %s129
    %s133 = sphi 0, %s132
    %s149 = sphi 0, %s133
  $region4: #{tpu_custom_call.1} parent=0 // loop_header_branch
    %14 = sbr.rel (%p12) target = $region8
  $region5: #{tpu_custom_call.1} parent=0 // loop_body
    %s16 = ssub.s32 %s11, 1
    %s17 = ssub.s32 %s11, 2
    %s24 = sadd.s32 1, %s19
    %p25 = scmp.ge.s32.totalorder %s24, 2
    %s26 = scalar_select %p25, 0, %s24
    %s27 = sadd.s32 1, %s18
    %s28 = scalar_select %p25, %s27, %s18
    %p29 = scmp.ge.s32.totalorder %s28, 2
    %s30 = scalar_select %p29, 0, %s28
    %s31 = ssub.s32 %s18, %s30
    %s32 = ssub.s32 %s19, %s26
    %s33 = sor.u32 %s31, %s32
    %p34 = scmp.eq.s32.totalorder %s33, 0
    %s36 = sadd.s32 %s35, 1
    %s37 = scalar_select %p34, %s35, %s36
    %p40 = pneg %p34
    %p41 = scmp.eq.s32.totalorder %s11, 3
    %p42 = por %p40, %p41
    %p43 = scmp.ne.s32.totalorder %s35, %s38
    %p44 = scmp.eq.s32.totalorder %s11, 0
    %p45 = por %p43, %p44
    %p46 = scmp.ne.s32.totalorder %s35, %s38
    %p47 = scmp.eq.s32.totalorder %s16, 3
    %p48 = por %p46, %p47
    %p49 = scmp.ne.s32.totalorder %s38, %s39
    %p50 = scmp.eq.s32.totalorder %s16, 0
    %p51 = por %p49, %p50
    %p52 = scmp.ne.s32.totalorder %s38, %s39
    %p53 = scmp.eq.s32.totalorder %s17, 3
    %p54 = por %p52, %p53
    %p56 = scmp.ne.s32.totalorder %s39, %s55
    %p57 = scmp.eq.s32.totalorder %s17, 0
    %p58 = por %p56, %p57
    %s60 = sadd.s32 %s59, 1
    %p63 = scmp.eq.s32.totalorder %s11, 3
    %p64 = scmp.ne.s32.totalorder %s59, %s61
    %p65 = scmp.eq.s32.totalorder %s11, 0
    %p66 = por %p64, %p65
    %p67 = scmp.ne.s32.totalorder %s59, %s61
    %p68 = scmp.eq.s32.totalorder %s16, 3
    %p69 = por %p67, %p68
    %p70 = scmp.ne.s32.totalorder %s61, %s62
    %p71 = scmp.eq.s32.totalorder %s16, 0
    %p72 = por %p70, %p71
    %p73 = scmp.ne.s32.totalorder %s61, %s62
    %p74 = scmp.eq.s32.totalorder %s17, 3
    %p75 = por %p73, %p74
    %p77 = scmp.ne.s32.totalorder %s62, %s76
    %p78 = scmp.eq.s32.totalorder %s17, 0
    %p79 = por %p77, %p78
    %s81 = sadd.s32 %s80, 1
    %p84 = scmp.eq.s32.totalorder %s11, 3
    %p85 = scmp.ne.s32.totalorder %s80, %s82
    %p86 = scmp.eq.s32.totalorder %s11, 0
    %p87 = por %p85, %p86
    %p88 = scmp.ne.s32.totalorder %s80, %s82
    %p89 = scmp.eq.s32.totalorder %s16, 3
    %p90 = por %p88, %p89
    %p91 = scmp.ne.s32.totalorder %s82, %s83
    %p92 = scmp.eq.s32.totalorder %s16, 0
    %p93 = por %p91, %p92
    %p94 = scmp.ne.s32.totalorder %s82, %s83
    %p95 = scmp.eq.s32.totalorder %s17, 3
    %p96 = por %p94, %p95
    %p98 = scmp.ne.s32.totalorder %s83, %s97
    %p99 = scmp.eq.s32.totalorder %s17, 0
    %p100 = por %p98, %p99
    %s101 = ssub.s32 %s18, %s30
    %p102 = scmp.eq.s32.totalorder %s101, 0
    %s104 = sadd.s32 %s103, 1
    %s105 = scalar_select %p102, %s103, %s104
    %p108 = pneg %p102
    %p109 = scmp.eq.s32.totalorder %s11, 3
    %p110 = por %p108, %p109
    %p111 = scmp.ne.s32.totalorder %s103, %s106
    %p112 = scmp.eq.s32.totalorder %s11, 0
    %p113 = por %p111, %p112
    %p114 = scmp.ne.s32.totalorder %s103, %s106
    %p115 = scmp.eq.s32.totalorder %s16, 3
    %p116 = por %p114, %p115
    %p117 = scmp.ne.s32.totalorder %s106, %s107
    %p118 = scmp.eq.s32.totalorder %s16, 0
    %p119 = por %p117, %p118
    %p120 = scmp.ne.s32.totalorder %s106, %s107
    %p121 = scmp.eq.s32.totalorder %s17, 3
    %p122 = por %p120, %p121
    %p124 = scmp.ne.s32.totalorder %s107, %s123
    %p125 = scmp.eq.s32.totalorder %s17, 0
    %p126 = por %p124, %p125
    %s127 = ssub.s32 %s18, %s30
    %p128 = scmp.eq.s32.totalorder %s127, 0
    %s130 = sadd.s32 %s129, 1
    %s131 = scalar_select %p128, %s129, %s130
    %p134 = pneg %p128
    %p135 = scmp.eq.s32.totalorder %s11, 3
    %p136 = por %p134, %p135
    %p137 = scmp.ne.s32.totalorder %s129, %s132
    %p138 = scmp.eq.s32.totalorder %s11, 0
    %p139 = por %p137, %p138
    %p140 = scmp.ne.s32.totalorder %s129, %s132
    %p141 = scmp.eq.s32.totalorder %s16, 3
    %p142 = por %p140, %p141
    %p143 = scmp.ne.s32.totalorder %s132, %s133
    %p144 = scmp.eq.s32.totalorder %s16, 0
    %p145 = por %p143, %p144
    %p146 = scmp.ne.s32.totalorder %s132, %s133
    %p147 = scmp.eq.s32.totalorder %s17, 3
    %p148 = por %p146, %p147
    %p150 = scmp.ne.s32.totalorder %s133, %s149
    %p151 = scmp.eq.s32.totalorder %s17, 0
    %p152 = por %p150, %p151
    %p153 = scmp.le.s32.totalorder 1, %s11
    %p154 = scmp.lt.s32.totalorder %s11, 5
    %p155 = pnand %p153, %p154
    %p156 = pneg %p155
    // Predicated region
    $region9: #{tpu_custom_call.1} parent=5 // pred_check
      _
    $region10: #{tpu_custom_call.1} parent=5 // pred_check_branch
      %158 = sbr.rel (%p155) target = $region12
    $region11: #{tpu_custom_call.1} parent=5 // pred_region
      %s159 = ssub.s32 %s11, 1
      // Predicated region
      $region13: #{tpu_custom_call.1} parent=11 // pred_check
        %p160 = pneg %p72
      $region14: #{tpu_custom_call.1} parent=11 // pred_check_branch
        %162 = sbr.rel (%p160) target = $region16
      $region15: #{tpu_custom_call.1} parent=11 // pred_region
        _
      $region16: #{tpu_custom_call.1} parent=11 // pred_fallthru
        _
      // Predicated region
      $region17: #{tpu_custom_call.1} parent=11 // pred_check
        %p163 = pneg %p93
      $region18: #{tpu_custom_call.1} parent=11 // pred_check_branch
        %165 = sbr.rel (%p163) target = $region20
      $region19: #{tpu_custom_call.1} parent=11 // pred_region
        _
      $region20: #{tpu_custom_call.1} parent=11 // pred_fallthru
        _
    $region12: #{tpu_custom_call.1} parent=5 // pred_fallthru
      _
    %p166 = scmp.lt.s32.totalorder %s11, 4
    // Predicated region
    $region21: #{tpu_custom_call.1} parent=5 // pred_check
      %p167 = pneg %p166
    $region22: #{tpu_custom_call.1} parent=5 // pred_check_branch
      %169 = sbr.rel (%p167) target = $region24
    $region23: #{tpu_custom_call.1} parent=5 // pred_region
      // Predicated region
      $region25: #{tpu_custom_call.1} parent=23 // pred_check
        %p170 = pneg %p45
      $region26: #{tpu_custom_call.1} parent=23 // pred_check_branch
        %172 = sbr.rel (%p170) target = $region28
      $region27: #{tpu_custom_call.1} parent=23 // pred_region
        %p173 = scmp.lt.s32.totalorder %s18, 1
        %s174 = scalar_select %p173, %s18, 1
        %p175 = scmp.lt.s32.totalorder %s19, 1
        %s176 = scalar_select %p175, %s19, 1
        %s177 = smul.addr %s174, 2
        %s178 = sadd.s32 %s176, %s177
        %s179 = smul.addr %s178, 4
        %s180 = scalar_lea.vmem %s0, %s179
      $region28: #{tpu_custom_call.1} parent=23 // pred_fallthru
        _
    $region24: #{tpu_custom_call.1} parent=5 // pred_fallthru
      _
    %p181 = scmp.le.s32.totalorder 1, %s11
    %p182 = scmp.lt.s32.totalorder %s11, 5
    %p183 = pnand %p181, %p182
    %p184 = pneg %p183
    // Predicated region
    $region29: #{tpu_custom_call.1} parent=5 // pred_check
      _
    $region30: #{tpu_custom_call.1} parent=5 // pred_check_branch
      %186 = sbr.rel (%p183) target = $region32
    $region31: #{tpu_custom_call.1} parent=5 // pred_region
      %s187 = ssub.s32 %s11, 1
      %p188 = scmp.lt.s32.totalorder %s20, 1
      %s189 = scalar_select %p188, %s20, 1
      %p190 = scmp.lt.s32.totalorder %s21, 1
      %s191 = scalar_select %p190, %s21, 1
      %s192 = smul.addr %s189, 2
      %s193 = sadd.s32 %s191, %s192
      %s194 = smul.addr %s193, 4
      %s195 = scalar_lea.vmem %s0, %s194
      %p196 = pneg %p51
      %p197 = pneg %p48
      %p198 = pneg %p72
      %p199 = pneg %p69
      %p200 = pneg %p93
      %p201 = pneg %p90
      %p202 = pneg %p119
      %p203 = pneg %p116
      %p204 = scmp.lt.s32.totalorder %s20, 1
      %s205 = scalar_select %p204, %s20, 1
      %s206 = smul.addr %s205, 8
      %s207 = smul.addr %s206, 8
      %s208 = scalar_lea.vmem %s3, %s207
      %p209 = pneg %p145
      %p210 = pneg %p142
      %p211 = scmp.lt.s32.totalorder %s20, 1
      %s212 = scalar_select %p211, %s20, 1
      %s213 = smul.addr %s212, 8
      %s214 = smul.addr %s213, 8
      %s215 = scalar_lea.vmem %s4, %s214
      %p216 = scmp.lt.s32.totalorder %s20, 1
      %s217 = scalar_select %p216, %s20, 1
      %p218 = scmp.lt.s32.totalorder %s21, 1
      %s219 = scalar_select %p218, %s21, 1
      %s220 = smul.addr %s217, 2
      %s221 = sadd.s32 %s219, %s220
      %s222 = smul.addr %s221, 4
      %s223 = scalar_lea.vmem %s0, %s222
      %p224 = scmp.lt.s32.totalorder %s20, 1
      %s225 = scalar_select %p224, %s20, 1
      %s226 = smul.addr %s225, 8
      %s227 = smul.addr %s226, 8
      %s228 = scalar_lea.vmem %s3, %s227
      %p229 = scmp.lt.s32.totalorder %s20, 1
      %s230 = scalar_select %p229, %s20, 1
      %s231 = smul.addr %s230, 8
      %s232 = smul.addr %s231, 8
      %s233 = scalar_lea.vmem %s4, %s232
      %p234 = scmp.eq.s32.totalorder %s21, 0
      // Predicated region
      $region33: #{tpu_custom_call.1} parent=31 // pred_check
        %p235 = pneg %p234
      $region34: #{tpu_custom_call.1} parent=31 // pred_check_branch
        %237 = sbr.rel (%p235) target = $region36
      $region35: #{tpu_custom_call.1} parent=31 // pred_region
        %vm238 = vcmask 7168
        %239 = vst.msk [vmem:[%s228] sm:$0xff] %vm238, 0.0
        %240 = vst.msk [vmem:[%s228 + $0x8] sm:$0xff] %vm238, 0.0
        %241 = vst.msk [vmem:[%s228 + $0x10] sm:$0xff] %vm238, 0.0
        %242 = vst.msk [vmem:[%s228 + $0x18] sm:$0xff] %vm238, 0.0
        %243 = vst.msk [vmem:[%s228 + $0x20] sm:$0xff] %vm238, 0.0
        %244 = vst.msk [vmem:[%s228 + $0x28] sm:$0xff] %vm238, 0.0
        %245 = vst.msk [vmem:[%s228 + $0x30] sm:$0xff] %vm238, 0.0
        %246 = vst.msk [vmem:[%s228 + $0x38] sm:$0xff] %vm238, 0.0
        %247 = vst.msk [vmem:[%s233] sm:$0xff] %vm238, 0.0
        %248 = vst.msk [vmem:[%s233 + $0x8] sm:$0xff] %vm238, 0.0
        %249 = vst.msk [vmem:[%s233 + $0x10] sm:$0xff] %vm238, 0.0
        %250 = vst.msk [vmem:[%s233 + $0x18] sm:$0xff] %vm238, 0.0
        %251 = vst.msk [vmem:[%s233 + $0x20] sm:$0xff] %vm238, 0.0
        %252 = vst.msk [vmem:[%s233 + $0x28] sm:$0xff] %vm238, 0.0
        %253 = vst.msk [vmem:[%s233 + $0x30] sm:$0xff] %vm238, 0.0
        %254 = vst.msk [vmem:[%s233 + $0x38] sm:$0xff] %vm238, 0.0
      $region36: #{tpu_custom_call.1} parent=31 // pred_fallthru
        _
      %v255 = vld [vmem:[%s223] sm:$0x7]
      %v256 = vld [vmem:[%s1] sm:$0xff]
      %v257 = vld [vmem:[%s1 + $0x8] sm:$0xff]
      %v258 = vld [vmem:[%s1 + $0x10] sm:$0xff]
      %v259 = vld [vmem:[%s1 + $0x18] sm:$0xff]
      %v260 = vld [vmem:[%s1 + $0x20] sm:$0xff]
      %v261 = vld [vmem:[%s1 + $0x28] sm:$0xff]
      %v262 = vld [vmem:[%s1 + $0x30] sm:$0xff]
      %v263 = vld [vmem:[%s1 + $0x38] sm:$0xff]
      %v264 = vld [vmem:[%s2] sm:$0xff]
      %v265 = vld [vmem:[%s2 + $0x8] sm:$0xff]
      %v266 = vld [vmem:[%s2 + $0x10] sm:$0xff]
      %v267 = vld [vmem:[%s2 + $0x18] sm:$0xff]
      %v268 = vld [vmem:[%s2 + $0x20] sm:$0xff]
      %v269 = vld [vmem:[%s2 + $0x28] sm:$0xff]
      %v270 = vld [vmem:[%s2 + $0x30] sm:$0xff]
      %v271 = vld [vmem:[%s2 + $0x38] sm:$0xff]
      %273 = vset.pattern.permute.xlu0 0
      %274 = vperm.xlu0 %273, %v256
      %v275 = vpop.permute.xlu0 %274
      %278 = vset.pattern.permute.xlu0 0
      %279 = vperm.xlu0 %278, %v257
      %v280 = vpop.permute.xlu0 %279
      %283 = vset.pattern.permute.xlu0 0
      %284 = vperm.xlu0 %283, %v258
      %v285 = vpop.permute.xlu0 %284
      %288 = vset.pattern.permute.xlu0 0
      %289 = vperm.xlu0 %288, %v259
      %v290 = vpop.permute.xlu0 %289
      %293 = vset.pattern.permute.xlu0 0
      %294 = vperm.xlu0 %293, %v260
      %v295 = vpop.permute.xlu0 %294
      %298 = vset.pattern.permute.xlu0 0
      %299 = vperm.xlu0 %298, %v261
      %v300 = vpop.permute.xlu0 %299
      %303 = vset.pattern.permute.xlu0 0
      %304 = vperm.xlu0 %303, %v262
      %v305 = vpop.permute.xlu0 %304
      %308 = vset.pattern.permute.xlu0 0
      %309 = vperm.xlu0 %308, %v263
      %v310 = vpop.permute.xlu0 %309
      %v312 = vperm.slane %v255, 0
      %v313 = vmul.f32 %v275, %v312
      %v314 = vmul.f32 %v280, %v312
      %v315 = vmul.f32 %v285, %v312
      %v316 = vmul.f32 %v290, %v312
      %v317 = vmul.f32 %v295, %v312
      %v318 = vmul.f32 %v300, %v312
      %v319 = vmul.f32 %v305, %v312
      %v320 = vmul.f32 %v310, %v312
      %321 = vset.pattern.permute.xlu0 1
      %322 = vperm.xlu0 %321, %v256
      %v323 = vpop.permute.xlu0 %322
      %325 = vset.pattern.permute.xlu0 1
      %326 = vperm.xlu0 %325, %v257
      %v327 = vpop.permute.xlu0 %326
      %329 = vset.pattern.permute.xlu0 1
      %330 = vperm.xlu0 %329, %v258
      %v331 = vpop.permute.xlu0 %330
      %333 = vset.pattern.permute.xlu0 1
      %334 = vperm.xlu0 %333, %v259
      %v335 = vpop.permute.xlu0 %334
      %337 = vset.pattern.permute.xlu0 1
      %338 = vperm.xlu0 %337, %v260
      %v339 = vpop.permute.xlu0 %338
      %341 = vset.pattern.permute.xlu0 1
      %342 = vperm.xlu0 %341, %v261
      %v343 = vpop.permute.xlu0 %342
      %345 = vset.pattern.permute.xlu0 1
      %346 = vperm.xlu0 %345, %v262
      %v347 = vpop.permute.xlu0 %346
      %349 = vset.pattern.permute.xlu0 1
      %350 = vperm.xlu0 %349, %v263
      %v351 = vpop.permute.xlu0 %350
      %v353 = vperm.slane %v255, 1
      %v354 = vmul.f32 %v323, %v353
      %v355 = vmul.f32 %v327, %v353
      %v356 = vmul.f32 %v331, %v353
      %v357 = vmul.f32 %v335, %v353
      %v358 = vmul.f32 %v339, %v353
      %v359 = vmul.f32 %v343, %v353
      %v360 = vmul.f32 %v347, %v353
      %v361 = vmul.f32 %v351, %v353
      %v362 = vadd.f32 %v313, %v354
      %v363 = vadd.f32 %v314, %v355
      %v364 = vadd.f32 %v315, %v356
      %v365 = vadd.f32 %v316, %v357
      %v366 = vadd.f32 %v317, %v358
      %v367 = vadd.f32 %v318, %v359
      %v368 = vadd.f32 %v319, %v360
      %v369 = vadd.f32 %v320, %v361
      %370 = vset.pattern.permute.xlu0 2
      %371 = vperm.xlu0 %370, %v256
      %v372 = vpop.permute.xlu0 %371
      %374 = vset.pattern.permute.xlu0 2
      %375 = vperm.xlu0 %374, %v257
      %v376 = vpop.permute.xlu0 %375
      %378 = vset.pattern.permute.xlu0 2
      %379 = vperm.xlu0 %378, %v258
      %v380 = vpop.permute.xlu0 %379
      %382 = vset.pattern.permute.xlu0 2
      %383 = vperm.xlu0 %382, %v259
      %v384 = vpop.permute.xlu0 %383
      %386 = vset.pattern.permute.xlu0 2
      %387 = vperm.xlu0 %386, %v260
      %v388 = vpop.permute.xlu0 %387
      %390 = vset.pattern.permute.xlu0 2
      %391 = vperm.xlu0 %390, %v261
      %v392 = vpop.permute.xlu0 %391
      %394 = vset.pattern.permute.xlu0 2
      %395 = vperm.xlu0 %394, %v262
      %v396 = vpop.permute.xlu0 %395
      %398 = vset.pattern.permute.xlu0 2
      %399 = vperm.xlu0 %398, %v263
      %v400 = vpop.permute.xlu0 %399
      %v402 = vperm.slane %v255, 2
      %v403 = vmul.f32 %v372, %v402
      %v404 = vmul.f32 %v376, %v402
      %v405 = vmul.f32 %v380, %v402
      %v406 = vmul.f32 %v384, %v402
      %v407 = vmul.f32 %v388, %v402
      %v408 = vmul.f32 %v392, %v402
      %v409 = vmul.f32 %v396, %v402
      %v410 = vmul.f32 %v400, %v402
      %v411 = vadd.f32 %v362, %v403
      %v412 = vadd.f32 %v363, %v404
      %v413 = vadd.f32 %v364, %v405
      %v414 = vadd.f32 %v365, %v406
      %v415 = vadd.f32 %v366, %v407
      %v416 = vadd.f32 %v367, %v408
      %v417 = vadd.f32 %v368, %v409
      %v418 = vadd.f32 %v369, %v410
      %420 = vset.pattern.permute.xlu0 0
      %421 = vperm.xlu0 %420, %v264
      %v422 = vpop.permute.xlu0 %421
      %425 = vset.pattern.permute.xlu0 0
      %426 = vperm.xlu0 %425, %v265
      %v427 = vpop.permute.xlu0 %426
      %430 = vset.pattern.permute.xlu0 0
      %431 = vperm.xlu0 %430, %v266
      %v432 = vpop.permute.xlu0 %431
      %435 = vset.pattern.permute.xlu0 0
      %436 = vperm.xlu0 %435, %v267
      %v437 = vpop.permute.xlu0 %436
      %440 = vset.pattern.permute.xlu0 0
      %441 = vperm.xlu0 %440, %v268
      %v442 = vpop.permute.xlu0 %441
      %445 = vset.pattern.permute.xlu0 0
      %446 = vperm.xlu0 %445, %v269
      %v447 = vpop.permute.xlu0 %446
      %450 = vset.pattern.permute.xlu0 0
      %451 = vperm.xlu0 %450, %v270
      %v452 = vpop.permute.xlu0 %451
      %455 = vset.pattern.permute.xlu0 0
      %456 = vperm.xlu0 %455, %v271
      %v457 = vpop.permute.xlu0 %456
      %v459 = vadd.f32 %v411, %v422
      %v460 = vadd.f32 %v412, %v427
      %v461 = vadd.f32 %v413, %v432
      %v462 = vadd.f32 %v414, %v437
      %v463 = vadd.f32 %v415, %v442
      %v464 = vadd.f32 %v416, %v447
      %v465 = vadd.f32 %v417, %v452
      %v466 = vadd.f32 %v418, %v457
      %v467 = vld [vmem:[%s228] sm:$0xff]
      %v468 = vld [vmem:[%s228 + $0x8] sm:$0xff]
      %v469 = vld [vmem:[%s228 + $0x10] sm:$0xff]
      %v470 = vld [vmem:[%s228 + $0x18] sm:$0xff]
      %v471 = vld [vmem:[%s228 + $0x20] sm:$0xff]
      %v472 = vld [vmem:[%s228 + $0x28] sm:$0xff]
      %v473 = vld [vmem:[%s228 + $0x30] sm:$0xff]
      %v474 = vld [vmem:[%s228 + $0x38] sm:$0xff]
      %475 = vadd.xlane.f32.xlu0 %v459
      %v476 = vpop.xlane.xlu0 %475
      %477 = vadd.xlane.f32.xlu0 %v460
      %v478 = vpop.xlane.xlu0 %477
      %479 = vadd.xlane.f32.xlu0 %v461
      %v480 = vpop.xlane.xlu0 %479
      %481 = vadd.xlane.f32.xlu0 %v462
      %v482 = vpop.xlane.xlu0 %481
      %483 = vadd.xlane.f32.xlu0 %v463
      %v484 = vpop.xlane.xlu0 %483
      %485 = vadd.xlane.f32.xlu0 %v464
      %v486 = vpop.xlane.xlu0 %485
      %487 = vadd.xlane.f32.xlu0 %v465
      %v488 = vpop.xlane.xlu0 %487
      %489 = vadd.xlane.f32.xlu0 %v466
      %v490 = vpop.xlane.xlu0 %489
      %v491 = vadd.f32 %v467, %v476
      %v492 = vadd.f32 %v468, %v478
      %v493 = vadd.f32 %v469, %v480
      %v494 = vadd.f32 %v470, %v482
      %v495 = vadd.f32 %v471, %v484
      %v496 = vadd.f32 %v472, %v486
      %v497 = vadd.f32 %v473, %v488
      %v498 = vadd.f32 %v474, %v490
      %vm499 = vcmask 7168
      %500 = vst.msk [vmem:[%s228] sm:$0xff] %vm499, %v491
      %501 = vst.msk [vmem:[%s228 + $0x8] sm:$0xff] %vm499, %v492
      %502 = vst.msk [vmem:[%s228 + $0x10] sm:$0xff] %vm499, %v493
      %503 = vst.msk [vmem:[%s228 + $0x18] sm:$0xff] %vm499, %v494
      %504 = vst.msk [vmem:[%s228 + $0x20] sm:$0xff] %vm499, %v495
      %505 = vst.msk [vmem:[%s228 + $0x28] sm:$0xff] %vm499, %v496
      %506 = vst.msk [vmem:[%s228 + $0x30] sm:$0xff] %vm499, %v497
      %507 = vst.msk [vmem:[%s228 + $0x38] sm:$0xff] %vm499, %v498
      %v508 = vld [vmem:[%s233] sm:$0xff]
      %v509 = vld [vmem:[%s233 + $0x8] sm:$0xff]
      %v510 = vld [vmem:[%s233 + $0x10] sm:$0xff]
      %v511 = vld [vmem:[%s233 + $0x18] sm:$0xff]
      %v512 = vld [vmem:[%s233 + $0x20] sm:$0xff]
      %v513 = vld [vmem:[%s233 + $0x28] sm:$0xff]
      %v514 = vld [vmem:[%s233 + $0x30] sm:$0xff]
      %v515 = vld [vmem:[%s233 + $0x38] sm:$0xff]
      %v516 = vmul.f32 %v459, %v459
      %v517 = vmul.f32 %v460, %v460
      %v518 = vmul.f32 %v461, %v461
      %v519 = vmul.f32 %v462, %v462
      %v520 = vmul.f32 %v463, %v463
      %v521 = vmul.f32 %v464, %v464
      %v522 = vmul.f32 %v465, %v465
      %v523 = vmul.f32 %v466, %v466
      %524 = vadd.xlane.f32.xlu0 %v516
      %v525 = vpop.xlane.xlu0 %524
      %526 = vadd.xlane.f32.xlu0 %v517
      %v527 = vpop.xlane.xlu0 %526
      %528 = vadd.xlane.f32.xlu0 %v518
      %v529 = vpop.xlane.xlu0 %528
      %530 = vadd.xlane.f32.xlu0 %v519
      %v531 = vpop.xlane.xlu0 %530
      %532 = vadd.xlane.f32.xlu0 %v520
      %v533 = vpop.xlane.xlu0 %532
      %534 = vadd.xlane.f32.xlu0 %v521
      %v535 = vpop.xlane.xlu0 %534
      %536 = vadd.xlane.f32.xlu0 %v522
      %v537 = vpop.xlane.xlu0 %536
      %538 = vadd.xlane.f32.xlu0 %v523
      %v539 = vpop.xlane.xlu0 %538
      %v540 = vadd.f32 %v508, %v525
      %v541 = vadd.f32 %v509, %v527
      %v542 = vadd.f32 %v510, %v529
      %v543 = vadd.f32 %v511, %v531
      %v544 = vadd.f32 %v512, %v533
      %v545 = vadd.f32 %v513, %v535
      %v546 = vadd.f32 %v514, %v537
      %v547 = vadd.f32 %v515, %v539
      %548 = vst.msk [vmem:[%s233] sm:$0xff] %vm499, %v540
      %549 = vst.msk [vmem:[%s233 + $0x8] sm:$0xff] %vm499, %v541
      %550 = vst.msk [vmem:[%s233 + $0x10] sm:$0xff] %vm499, %v542
      %551 = vst.msk [vmem:[%s233 + $0x18] sm:$0xff] %vm499, %v543
      %552 = vst.msk [vmem:[%s233 + $0x20] sm:$0xff] %vm499, %v544
      %553 = vst.msk [vmem:[%s233 + $0x28] sm:$0xff] %vm499, %v545
      %554 = vst.msk [vmem:[%s233 + $0x30] sm:$0xff] %vm499, %v546
      %555 = vst.msk [vmem:[%s233 + $0x38] sm:$0xff] %vm499, %v547
      %p556 = scmp.lt.s32.totalorder %s20, 1
      %s557 = scalar_select %p556, %s20, 1
      %s558 = smul.addr %s557, 8
      %s559 = smul.addr %s558, 8
      %s560 = scalar_lea.vmem %s3, %s559
      %p561 = scmp.lt.s32.totalorder %s20, 1
      %s562 = scalar_select %p561, %s20, 1
      %s563 = smul.addr %s562, 8
      %s564 = smul.addr %s563, 8
      %s565 = scalar_lea.vmem %s4, %s564
      // Predicated region
      $region37: #{tpu_custom_call.1} parent=31 // pred_check
        %p566 = pneg %p116
      $region38: #{tpu_custom_call.1} parent=31 // pred_check_branch
        %568 = sbr.rel (%p566) target = $region40
      $region39: #{tpu_custom_call.1} parent=31 // pred_region
        _
      $region40: #{tpu_custom_call.1} parent=31 // pred_fallthru
        _
      // Predicated region
      $region41: #{tpu_custom_call.1} parent=31 // pred_check
        %p569 = pneg %p142
      $region42: #{tpu_custom_call.1} parent=31 // pred_check_branch
        %571 = sbr.rel (%p569) target = $region44
      $region43: #{tpu_custom_call.1} parent=31 // pred_region
        _
      $region44: #{tpu_custom_call.1} parent=31 // pred_fallthru
        _
    $region32: #{tpu_custom_call.1} parent=5 // pred_fallthru
      _
    %p572 = scmp.le.s32.totalorder 2, %s11
    // Predicated region
    $region45: #{tpu_custom_call.1} parent=5 // pred_check
      %p573 = pneg %p572
    $region46: #{tpu_custom_call.1} parent=5 // pred_check_branch
      %575 = sbr.rel (%p573) target = $region48
    $region47: #{tpu_custom_call.1} parent=5 // pred_region
      %s576 = ssub.s32 %s11, 2
      // Predicated region
      $region49: #{tpu_custom_call.1} parent=47 // pred_check
        %p577 = pneg %p122
      $region50: #{tpu_custom_call.1} parent=47 // pred_check_branch
        %579 = sbr.rel (%p577) target = $region52
      $region51: #{tpu_custom_call.1} parent=47 // pred_region
        %p580 = scmp.lt.s32.totalorder %s22, 1
        %s581 = scalar_select %p580, %s22, 1
        %s582 = smul.addr %s581, 8
        %s583 = smul.addr %s582, 8
        %s584 = scalar_lea.vmem %s3, %s583
      $region52: #{tpu_custom_call.1} parent=47 // pred_fallthru
        _
      // Predicated region
      $region53: #{tpu_custom_call.1} parent=47 // pred_check
        %p585 = pneg %p148
      $region54: #{tpu_custom_call.1} parent=47 // pred_check_branch
        %587 = sbr.rel (%p585) target = $region56
      $region55: #{tpu_custom_call.1} parent=47 // pred_region
        %p588 = scmp.lt.s32.totalorder %s22, 1
        %s589 = scalar_select %p588, %s22, 1
        %s590 = smul.addr %s589, 8
        %s591 = smul.addr %s590, 8
        %s592 = scalar_lea.vmem %s4, %s591
      $region56: #{tpu_custom_call.1} parent=47 // pred_fallthru
        _
    $region48: #{tpu_custom_call.1} parent=5 // pred_fallthru
      _
  $region6: #{tpu_custom_call.1} parent=0 // loop_footer
    %s15 = sadd.s32 1, %s11
  $region7: #{tpu_custom_call.1} parent=0 // loop_footer_branch
    %10 = sbr.rel target = $region3
  $region8: #{tpu_custom_call.1} parent=0 // loop_exit
    _

</llo_original>
